<compile_context>
chip_gen: v7x
topology: tpu7x:2x2x1
jax: 0.10.0
libtpu: 0.0.40
codegen_flags: <defaults>
</compile_context>

<pallas_src>
import numpy as np
import jax
import jax.numpy as jnp
from jax import lax
from jax.experimental import pallas as pl
from jax.experimental.pallas import tpu as pltpu

# ------------------------ small but faithful configuration ------------------------
B = 2                    # batch
WINDOWS = [20, 8]        # temporal window lengths (defaults are [100, 10])
INPUT_CHANNELS = 2       # temporal channels (default 6)
SCALE_SIZE = 1
OUT_CNN = 8              # out_cnn_size
META_SIZE = 2
HIDDEN_DIMS = [32, 16]
OUT_SOFTMAX = 3          # output_size_softmax
OUT_LINEAR = 0           # output_size_linear (default) -> pure softmax head
N_OUT = OUT_SOFTMAX + OUT_LINEAR
C = INPUT_CHANNELS
BC = B * C               # number of independent conv streams


def conv_arch(w, input_channel=1):
    """Replicates conv_layer.__init__ architecture derivation exactly."""
    wtemp = w
    k_size = 7 if wtemp > 70 else 5 if (wtemp <= 70 and wtemp > 30) else 3
    layers = []
    channels_in = input_channel
    channels_out = 16
    while wtemp > k_size:
        k_size = 7 if wtemp > 50 else 5 if (wtemp < 50 and wtemp > 15) else 3
        layers.append((channels_in, channels_out, k_size))
        wtemp = (wtemp - 2 * k_size // 2) / 2
        channels_in = channels_out
        channels_out *= 2
    return layers, channels_in  # list of (cin, cout, k), final channel count


ARCH = [conv_arch(w) for w in WINDOWS]
CONV_FEAT = OUT_CNN * len(WINDOWS) * C            # per-batch conv feature size
H = HIDDEN_DIMS


# ------------------------ deterministic parameter init ------------------------
def init_params(key):
    params = {}
    keys = iter(jax.random.split(key, 256))

    def nrm(shape, scale=0.1):
        return scale * jax.random.normal(next(keys), shape, dtype=jnp.float32)

    for i, w in enumerate(WINDOWS):
        layers, ch_fin = conv_arch(w)
        params[f"conv_w_{i}"] = [nrm((INPUT_CHANNELS, cout, cin, k))
                                 for (cin, cout, k) in layers]
        params[f"conv_b_{i}"] = [nrm((INPUT_CHANNELS, cout))
                                 for (cin, cout, k) in layers]
        params[f"fcs_w_{i}"] = nrm((INPUT_CHANNELS, OUT_CNN, ch_fin + SCALE_SIZE))
        params[f"fcs_b_{i}"] = nrm((INPUT_CHANNELS, OUT_CNN))
    d_in = CONV_FEAT + META_SIZE
    dims = [d_in] + HIDDEN_DIMS
    params["fc_w"] = [nrm((dims[l + 1], dims[l])) for l in range(len(HIDDEN_DIMS))]
    params["fc_b"] = [nrm((dims[l + 1],)) for l in range(len(HIDDEN_DIMS))]
    params["mu_w"] = nrm((N_OUT, HIDDEN_DIMS[-1]))
    params["mu_b"] = nrm((N_OUT,))
    return params


# ------------------------ pure-JAX reference (torch semantics) ------------------------
def reference_forward(params, rws, scale_prms, meta_prms):
    feats = []
    for i, w in enumerate(WINDOWS):
        layers, _ = conv_arch(w)
        for c in range(INPUT_CHANNELS):
            x = rws[i][:, c:c + 1, :]                                  # (B, 1, W)  NCL
            for l, (cin, cout, k) in enumerate(layers):
                wgt = params[f"conv_w_{i}"][l][c]                       # (cout, cin, k)
                bia = params[f"conv_b_{i}"][l][c]
                x = lax.conv_general_dilated(
                    x, wgt, window_strides=(1,), padding="VALID",
                    dimension_numbers=("NCH", "OIH", "NCH"),
                    precision=lax.Precision.HIGHEST)
                x = jax.nn.relu(x + bia[None, :, None])
                x = lax.reduce_window(x, -jnp.inf, lax.max,
                                      (1, 1, 2), (1, 1, 2), "VALID")    # MaxPool1d(2)
            pooled = jnp.mean(x, axis=2)                                # AdaptiveAvgPool1d(1)+squeeze
            cat = jnp.concatenate([pooled, scale_prms[i]], axis=1)
            fw = params[f"fcs_w_{i}"][c]
            fb = params[f"fcs_b_{i}"][c]
            feats.append(jax.nn.relu(cat @ fw.T + fb[None, :]))
    h = jnp.concatenate(feats + [meta_prms], axis=1)
    for l in range(len(HIDDEN_DIMS)):
        h = jax.nn.relu(h @ params["fc_w"][l].T + params["fc_b"][l][None, :])
    logits = h @ params["mu_w"].T + params["mu_b"][None, :]
    return jnp.squeeze(jax.nn.softmax(logits, axis=1))


# ------------------------ host-side (NumPy) operand slab packer ------------------------
class _RowPacker:
    """Packs small 2-D f32 arrays into one (rows, width) slab.  Every piece
    starts at an 8-row-aligned offset so the in-kernel static slices stay
    sublane-aligned.  Offsets/shapes are Python metadata (zero runtime cost)."""

    def __init__(self, width):
        self.width = width
        self.meta = {}
        self._pieces = []
        self._row = 0

    def add(self, name, arr):
        arr = np.asarray(arr, np.float32)
        if arr.ndim == 1:
            arr = arr[None, :]
        r, c = arr.shape
        assert c <= self.width, (name, c, self.width)
        rp = -(-r // 8) * 8
        buf = np.zeros((rp, self.width), np.float32)
        buf[:r, :c] = arr
        self.meta[name] = (self._row, r, c)
        self._pieces.append(buf)
        self._row += rp

    def slab(self):
        if not self._pieces:
            return np.zeros((8, self.width), np.float32)
        return np.concatenate(self._pieces, axis=0)

    def read(self, ref, name):
        off, r, c = self.meta[name]
        return ref[off:off + r, 0:c]


def _pack_params(params):
    """Builds the two constant parameter slabs (128-lane and 64-lane wide).
    Runs ONCE at init on the host; nothing here is traced per call."""
    wide = _RowPacker(128)
    narrow = _RowPacker(64)

    def put(name, arr):
        arr = np.asarray(arr, np.float32)
        if arr.ndim == 1:
            arr = arr[None, :]
        (narrow if arr.shape[1] <= 64 else wide).add(name, arr)

    g = lambda x: np.asarray(x, np.float32)

    # ---- conv layers: row-stacked per-tap block-diag weights (1 matmul/layer)
    for i, (layers, _) in enumerate(ARCH):
        for l, (cin, cout, k) in enumerate(layers):
            w_l = g(params[f"conv_w_{i}"][l])                     # (C, cout, cin, k)
            b_l = g(params[f"conv_b_{i}"][l])                     # (C, cout)
            w_cat = np.zeros((k * BC * cin, BC * cout), np.float32)
            for j in range(k):
                for s in range(BC):
                    c = s % C
                    w_cat[j * BC * cin + s * cin: j * BC * cin + (s + 1) * cin,
                          s * cout:(s + 1) * cout] = w_l[c, :, :, j].T
            put(f"w{i}_{l}", w_cat)
            put(f"b{i}_{l}", np.tile(b_l.reshape(1, C * cout), (1, B)))
        # pooling needs no parameters any more (done with shifted max + iota mask)

    # ---- fc_scaler of ALL windows fused into one matmul.  Row order matches
    #      the kernel's concat([pooled_0, scale_0, pooled_1, scale_1, ...]).
    n_feat = len(WINDOWS) * BC * OUT_CNN
    rows = sum(BC * (chf + SCALE_SIZE) for (_, chf) in ARCH)
    w_fcs = np.zeros((rows, n_feat), np.float32)
    b_fcs = np.zeros((1, n_feat), np.float32)
    r0 = 0
    for i, (_, chf) in enumerate(ARCH):
        fw = g(params[f"fcs_w_{i}"])                              # (C, OUT_CNN, chf+scale)
        fb = g(params[f"fcs_b_{i}"])                              # (C, OUT_CNN)
        col0 = i * BC * OUT_CNN
        for s in range(BC):
            c = s % C
            cols = slice(col0 + s * OUT_CNN, col0 + (s + 1) * OUT_CNN)
            w_fcs[r0 + s * chf: r0 + (s + 1) * chf, cols] = fw[c, :, :chf].T
        r0 += BC * chf
        for s in range(BC):
            c = s % C
            cols = slice(col0 + s * OUT_CNN, col0 + (s + 1) * OUT_CNN)
            w_fcs[r0 + s * SCALE_SIZE: r0 + (s + 1) * SCALE_SIZE, cols] = fw[c, :, chf:].T
        r0 += BC * SCALE_SIZE
        b_fcs[0, col0:col0 + BC * OUT_CNN] = np.tile(fb.reshape(C * OUT_CNN), B)
    put("w_fcs", w_fcs)
    put("b_fcs", b_fcs)

    # ---- fc0 fused over [feat | meta], block-diag over batch
    w0t = g(params["fc_w"][0]).T                                  # (d_in, H0)
    w_fc0 = np.zeros((n_feat + B * META_SIZE, B * H[0]), np.float32)
    for i in range(len(WINDOWS)):
        for s in range(BC):
            b, c = divmod(s, C)
            rr = i * BC * OUT_CNN + s * OUT_CNN
            src = (i * C + c) * OUT_CNN
            w_fc0[rr:rr + OUT_CNN, b * H[0]:(b + 1) * H[0]] = w0t[src:src + OUT_CNN, :]
    for b in range(B):
        w_fc0[n_feat + b * META_SIZE: n_feat + (b + 1) * META_SIZE,
              b * H[0]:(b + 1) * H[0]] = w0t[CONV_FEAT:, :]
    put("w_fc0", w_fc0)
    put("b_fc0", np.tile(g(params["fc_b"][0]).reshape(1, H[0]), (1, B)))

    # ---- hidden encoder layers, block-diag over batch
    for l in range(1, len(H)):
        wl = g(params["fc_w"][l]).T                               # (H[l-1], H[l])
        blk = np.zeros((B * H[l - 1], B * H[l]), np.float32)
        for b in range(B):
            blk[b * H[l - 1]:(b + 1) * H[l - 1], b * H[l]:(b + 1) * H[l]] = wl
        put(f"w_fc{l}", blk)
        put(f"b_fc{l}", np.tile(g(params["fc_b"][l]).reshape(1, H[l]), (1, B)))

    # ---- head: ONE block-diag matmul for all batch elements
    mu_t = g(params["mu_w"]).T                                    # (H[-1], N_OUT)
    w_mu = np.zeros((B * H[-1], B * N_OUT), np.float32)
    for b in range(B):
        w_mu[b * H[-1]:(b + 1) * H[-1], b * N_OUT:(b + 1) * N_OUT] = mu_t
    put("w_mu", w_mu)
    put("b_mu", np.tile(g(params["mu_b"]).reshape(1, N_OUT), (1, B)))

    return wide, narrow


# ------------------------ per-call data slab (layout plumbing only) ------------------------
_DATA_META = {}
_DATA_ORDER = []
_DATA_W = max(BC, BC * SCALE_SIZE, B * META_SIZE)


def _build_data_layout():
    row = 0

    def add(name, r, c):
        nonlocal row
        _DATA_META[name] = (row, r, c)
        _DATA_ORDER.append(name)
        row += -(-r // 8) * 8

    for i, w in enumerate(WINDOWS):
        add(f"x{i}", w, BC)
        add(f"scale{i}", 1, BC * SCALE_SIZE)
    add("meta", 1, B * META_SIZE)
    return row


_DATA_ROWS = _build_data_layout()


def _pack_data(rws, scale_prms, meta_prms):
    pieces = {}
    for i, w in enumerate(WINDOWS):
        # stream s = b*C + c on lanes, time on sublanes
        pieces[f"x{i}"] = jnp.transpose(rws[i], (2, 0, 1)).reshape(w, BC)
        pieces[f"scale{i}"] = jnp.repeat(scale_prms[i], C, axis=0).reshape(1, BC * SCALE_SIZE)
    pieces["meta"] = meta_prms.reshape(1, B * META_SIZE)
    parts = []
    for name in _DATA_ORDER:
        _, r, c = _DATA_META[name]
        a = pieces[name].astype(jnp.float32)
        rp = -(-r // 8) * 8
        parts.append(jnp.pad(a, ((0, rp - r), (0, _DATA_W - c))))
    return jnp.concatenate(parts, axis=0)


def _read_data(ref, name):
    off, r, c = _DATA_META[name]
    return ref[off:off + r, 0:c]


# ------------------------ Pallas forward ------------------------
def build_forward(params):
    wide, narrow = _pack_params(params)                 # host-side, once

    def kernel(data_ref, wide_ref, narrow_ref, out_ref):
        rd = lambda name: _read_data(data_ref, name)
        pp = lambda name: (wide.read(wide_ref, name) if name in wide.meta
                           else narrow.read(narrow_ref, name))
        mm = lambda a, w: jnp.dot(a, w, preferred_element_type=jnp.float32)

        pooled = []
        for i, (layers, _) in enumerate(ARCH):
            z = rd(f"x{i}")            # (W_i, BC*cin), lane = s*cin + ci
            Z = WINDOWS[i]             # rows of z
            stride = 1                 # conceptual row m lives at z[stride*m]
            T = WINDOWS[i]             # conceptual (pooled) length
            for l, (cin, cout, k) in enumerate(layers):
                l_out = T - k + 1
                L = Z - stride * (k - 1)
                # Conv1d (VALID): lane-concat the k stride-shifted views and hit
                # the row-stacked block-diag tap weights with ONE matmul.
                xcat = jnp.concatenate(
                    [z[stride * j:stride * j + L, :] for j in range(k)], axis=1)
                y = jnp.maximum(mm(xcat, pp(f"w{i}_{l}")) + pp(f"b{i}_{l}"), 0.0)
                # MaxPool1d(2): pairwise max at distance `stride`; keep full
                # resolution and double the stride -> no selection matmul.
                z = jnp.maximum(y[0:L - stride, :], y[stride:L, :])
                Z = L - stride
                stride *= 2
                T = l_out // 2
            # AdaptiveAvgPool1d(1): mean of the T conceptual rows 0, stride, ...
            ridx = lax.broadcasted_iota(jnp.int32, z.shape, 0)
            mask = ((ridx & (stride - 1)) == 0) & (ridx <= stride * (T - 1))
            pooled.append(jnp.sum(jnp.where(mask, z, 0.0), axis=0, keepdims=True)
                          * (1.0 / T))

        # fc_scaler of all windows in one matmul on cat(pooled_i, scale_i)
        v = jnp.concatenate(
            [piece for i in range(len(WINDOWS))
             for piece in (pooled[i], rd(f"scale{i}"))], axis=1)
        feat = jnp.maximum(mm(v, pp("w_fcs")) + pp("b_fcs"), 0.0)     # (1, 2*BC*OUT_CNN)

        # encoder: fc0 consumes [feat | meta] in one matmul, then hidden layers
        enc_in = jnp.concatenate([feat, rd("meta")], axis=1)
        h = jnp.maximum(mm(enc_in, pp("w_fc0")) + pp("b_fc0"), 0.0)   # (1, B*H0)
        for l in range(1, len(H)):
            h = jnp.maximum(mm(h, pp(f"w_fc{l}")) + pp(f"b_fc{l}"), 0.0)

        # head: one block-diag matmul -> (1, B*N_OUT); per-batch 3-lane
        # softmax (dim=1); single full store.
        lg = mm(h, pp("w_mu")) + pp("b_mu")
        parts = []
        for b in range(B):
            seg = lg[:, b * N_OUT:(b + 1) * N_OUT]
            m = jnp.max(seg, axis=1, keepdims=True)
            e = jnp.exp(seg - m)
            inv = pl.reciprocal(jnp.sum(e, axis=1, keepdims=True), approx=True)
            parts.append(e * inv)
        out_ref[...] = jnp.concatenate(parts, axis=1)

    pallas_fn = pl.pallas_call(
        kernel,
        out_shape=jax.ShapeDtypeStruct((1, B * N_OUT), jnp.float32),
        in_specs=[pl.BlockSpec(memory_space=pltpu.MemorySpace.VMEM)] * 3,
        out_specs=pl.BlockSpec(memory_space=pltpu.MemorySpace.VMEM),
    )
    # TODO(synk): at the default RWNet config (windows=[100,10], channels=6,
    # real batch) the block-diag slabs grow ~BC^2; before scaling up, move
    # streams onto a ("parallel",) grid axis (keeps v7x's 64 MiB VMEM safe and
    # uses both TensorCores).  At this toy size a grid would be pure overhead.

    wide_slab = jnp.asarray(wide.slab())        # constants, built once
    narrow_slab = jnp.asarray(narrow.slab())

    @jax.jit
    def forward(rws, scale_prms, meta_prms):
        data_slab = _pack_data(rws, scale_prms, meta_prms)
        out = pallas_fn(data_slab, wide_slab, narrow_slab)
        # torch.squeeze(...) at the end of RWNet.forward (no-op for B=2, N_OUT=3)
        return jnp.squeeze(out.reshape(B, N_OUT))

    return forward


if __name__ == "__main__":
    key = jax.random.PRNGKey(0)
    kp, kd = jax.random.split(key)
    params = init_params(kp)
    dkeys = jax.random.split(kd, 2 * len(WINDOWS) + 1)
    rws = [jax.random.normal(dkeys[i], (B, INPUT_CHANNELS, WINDOWS[i]), dtype=jnp.float32)
           for i in range(len(WINDOWS))]
    scale_prms = [jax.random.normal(dkeys[len(WINDOWS) + i], (B, SCALE_SIZE), dtype=jnp.float32)
                  for i in range(len(WINDOWS))]
    meta_prms = jax.random.normal(dkeys[-1], (B, META_SIZE), dtype=jnp.float32)

    fwd = build_forward(params)
    out = jax.block_until_ready(fwd(rws, scale_prms, meta_prms))
    ref = jax.block_until_ready(reference_forward(params, rws, scale_prms, meta_prms))
    assert out.shape == ref.shape, (out.shape, ref.shape)
    assert jnp.allclose(out, ref, atol=2e-3, rtol=2e-3), (out, ref)
    print("KERNEL_OK")
</pallas_src>

<mosaic_0001>
module attributes {stable_mosaic.version = 11 : i64} {
  func.func @kernel(%arg0: memref<56x4xf32, #tpu.memory_space<vmem>>, %arg1: memref<200x128xf32, #tpu.memory_space<vmem>>, %arg2: memref<456x64xf32, #tpu.memory_space<vmem>>, %arg3: memref<1x6xf32, #tpu.memory_space<vmem>>) attributes {dimension_semantics = [], scalar_prefetch = 0 : i64, scratch_operands = 0 : i64, tpu.core_type = #tpu.core_type<tc>} {
    %c0 = arith.constant 0 : index
    %c0_0 = arith.constant 0 : index
    %0 = vector.load %arg0[%c0, %c0_0] : memref<56x4xf32, #tpu.memory_space<vmem>>, vector<20x4xf32>
    %1 = vector.extract_strided_slice %0 {offsets = [0, 0], sizes = [16, 4], strides = [1, 1]} : vector<20x4xf32> to vector<16x4xf32>
    %2 = vector.extract_strided_slice %0 {offsets = [1, 0], sizes = [16, 4], strides = [1, 1]} : vector<20x4xf32> to vector<16x4xf32>
    %3 = vector.extract_strided_slice %0 {offsets = [2, 0], sizes = [16, 4], strides = [1, 1]} : vector<20x4xf32> to vector<16x4xf32>
    %4 = vector.extract_strided_slice %0 {offsets = [3, 0], sizes = [16, 4], strides = [1, 1]} : vector<20x4xf32> to vector<16x4xf32>
    %5 = vector.extract_strided_slice %0 {offsets = [4, 0], sizes = [16, 4], strides = [1, 1]} : vector<20x4xf32> to vector<16x4xf32>
    %6 = tpu.concatenate %1, %2, %3, %4, %5 in 1 : vector<16x4xf32>, vector<16x4xf32>, vector<16x4xf32>, vector<16x4xf32>, vector<16x4xf32> -> vector<16x20xf32>
    %c0_1 = arith.constant 0 : index
    %c0_2 = arith.constant 0 : index
    %7 = vector.load %arg2[%c0_1, %c0_2] : memref<456x64xf32, #tpu.memory_space<vmem>>, vector<20x64xf32>
    %cst = arith.constant dense<0.000000e+00> : vector<16x64xf32>
    %8 = tpu.matmul %6, %7, %cst {dimension_numbers = #tpu.dot_dimension_numbers<[1], [0], [0], [1], [0, 0, 1, 1], [], []>} : vector<16x20xf32>, vector<20x64xf32>, vector<16x64xf32> -> vector<16x64xf32>
    %c24 = arith.constant 24 : index
    %c0_3 = arith.constant 0 : index
    %9 = vector.load %arg2[%c24, %c0_3] : memref<456x64xf32, #tpu.memory_space<vmem>>, vector<1x64xf32>
    %10 = vector.broadcast %9 : vector<1x64xf32> to vector<16x64xf32>
    %11 = arith.addf %8, %10 : vector<16x64xf32>
    %cst_4 = arith.constant 0.000000e+00 : f32
    %12 = vector.broadcast %cst_4 : f32 to vector<16x64xf32>
    %13 = arith.maximumf %11, %12 : vector<16x64xf32>
    %14 = vector.extract_strided_slice %13 {offsets = [0, 0], sizes = [15, 64], strides = [1, 1]} : vector<16x64xf32> to vector<15x64xf32>
    %15 = vector.extract_strided_slice %13 {offsets = [1, 0], sizes = [15, 64], strides = [1, 1]} : vector<16x64xf32> to vector<15x64xf32>
    %16 = arith.maximumf %14, %15 : vector<15x64xf32>
    %17 = vector.extract_strided_slice %16 {offsets = [0, 0], sizes = [11, 64], strides = [1, 1]} : vector<15x64xf32> to vector<11x64xf32>
    %18 = vector.extract_strided_slice %16 {offsets = [2, 0], sizes = [11, 64], strides = [1, 1]} : vector<15x64xf32> to vector<11x64xf32>
    %19 = vector.extract_strided_slice %16 {offsets = [4, 0], sizes = [11, 64], strides = [1, 1]} : vector<15x64xf32> to vector<11x64xf32>
    %20 = tpu.concatenate %17, %18, %19 in 1 : vector<11x64xf32>, vector<11x64xf32>, vector<11x64xf32> -> vector<11x192xf32>
    %c0_5 = arith.constant 0 : index
    %c0_6 = arith.constant 0 : index
    %21 = vector.load %arg1[%c0_5, %c0_6] : memref<200x128xf32, #tpu.memory_space<vmem>>, vector<192x128xf32>
    %cst_7 = arith.constant dense<0.000000e+00> : vector<11x128xf32>
    %22 = tpu.matmul %20, %21, %cst_7 {dimension_numbers = #tpu.dot_dimension_numbers<[1], [0], [0], [1], [0, 0, 1, 1], [], []>} : vector<11x192xf32>, vector<192x128xf32>, vector<11x128xf32> -> vector<11x128xf32>
    %c192 = arith.constant 192 : index
    %c0_8 = arith.constant 0 : index
    %23 = vector.load %arg1[%c192, %c0_8] : memref<200x128xf32, #tpu.memory_space<vmem>>, vector<1x128xf32>
    %24 = vector.broadcast %23 : vector<1x128xf32> to vector<11x128xf32>
    %25 = arith.addf %22, %24 : vector<11x128xf32>
    %cst_9 = arith.constant 0.000000e+00 : f32
    %26 = vector.broadcast %cst_9 : f32 to vector<11x128xf32>
    %27 = arith.maximumf %25, %26 : vector<11x128xf32>
    %28 = vector.extract_strided_slice %27 {offsets = [0, 0], sizes = [9, 128], strides = [1, 1]} : vector<11x128xf32> to vector<9x128xf32>
    %29 = vector.extract_strided_slice %27 {offsets = [2, 0], sizes = [9, 128], strides = [1, 1]} : vector<11x128xf32> to vector<9x128xf32>
    %30 = arith.maximumf %28, %29 : vector<9x128xf32>
    %31 = tpu.iota {dimensions = array<i32: 0>} : vector<9x128xi32>
    %c3_i32 = arith.constant 3 : i32
    %32 = vector.broadcast %c3_i32 : i32 to vector<9x128xi32>
    %33 = arith.andi %31, %32 : vector<9x128xi32>
    %c0_i32 = arith.constant 0 : i32
    %34 = vector.broadcast %c0_i32 : i32 to vector<9x128xi32>
    %35 = arith.cmpi eq, %33, %34 : vector<9x128xi32>
    %c8_i32 = arith.constant 8 : i32
    %36 = vector.broadcast %c8_i32 : i32 to vector<9x128xi32>
    %37 = arith.cmpi sle, %31, %36 : vector<9x128xi32>
    %38 = arith.andi %35, %37 : vector<9x128xi1>
    %cst_10 = arith.constant 0.000000e+00 : f32
    %39 = vector.broadcast %cst_10 : f32 to vector<9x128xf32>
    %40 = arith.select %38, %30, %39 : vector<9x128xi1>, vector<9x128xf32>
    %cst_11 = arith.constant dense<0.000000e+00> : vector<128xf32>
    %41 = vector.multi_reduction <add>, %40, %cst_11 [0] : vector<9x128xf32> to vector<128xf32>
    %42 = vector.shape_cast %41 : vector<128xf32> to vector<1x128xf32>
    %cst_12 = arith.constant 0.333333343 : f32
    %43 = vector.broadcast %cst_12 : f32 to vector<1x128xf32>
    %44 = arith.mulf %42, %43 : vector<1x128xf32>
    %c32 = arith.constant 32 : index
    %c0_13 = arith.constant 0 : index
    %45 = vector.load %arg0[%c32, %c0_13] : memref<56x4xf32, #tpu.memory_space<vmem>>, vector<8x4xf32>
    %46 = vector.extract_strided_slice %45 {offsets = [0, 0], sizes = [6, 4], strides = [1, 1]} : vector<8x4xf32> to vector<6x4xf32>
    %47 = vector.extract_strided_slice %45 {offsets = [1, 0], sizes = [6, 4], strides = [1, 1]} : vector<8x4xf32> to vector<6x4xf32>
    %48 = vector.extract_strided_slice %45 {offsets = [2, 0], sizes = [6, 4], strides = [1, 1]} : vector<8x4xf32> to vector<6x4xf32>
    %49 = tpu.concatenate %46, %47, %48 in 1 : vector<6x4xf32>, vector<6x4xf32>, vector<6x4xf32> -> vector<6x12xf32>
    %c32_14 = arith.constant 32 : index
    %c0_15 = arith.constant 0 : index
    %50 = vector.load %arg2[%c32_14, %c0_15] : memref<456x64xf32, #tpu.memory_space<vmem>>, vector<12x64xf32>
    %cst_16 = arith.constant dense<0.000000e+00> : vector<6x64xf32>
    %51 = tpu.matmul %49, %50, %cst_16 {dimension_numbers = #tpu.dot_dimension_numbers<[1], [0], [0], [1], [0, 0, 1, 1], [], []>} : vector<6x12xf32>, vector<12x64xf32>, vector<6x64xf32> -> vector<6x64xf32>
    %c48 = arith.constant 48 : index
    %c0_17 = arith.constant 0 : index
    %52 = vector.load %arg2[%c48, %c0_17] : memref<456x64xf32, #tpu.memory_space<vmem>>, vector<1x64xf32>
    %53 = vector.broadcast %52 : vector<1x64xf32> to vector<6x64xf32>
    %54 = arith.addf %51, %53 : vector<6x64xf32>
    %cst_18 = arith.constant 0.000000e+00 : f32
    %55 = vector.broadcast %cst_18 : f32 to vector<6x64xf32>
    %56 = arith.maximumf %54, %55 : vector<6x64xf32>
    %57 = vector.extract_strided_slice %56 {offsets = [0, 0], sizes = [5, 64], strides = [1, 1]} : vector<6x64xf32> to vector<5x64xf32>
    %58 = vector.extract_strided_slice %56 {offsets = [1, 0], sizes = [5, 64], strides = [1, 1]} : vector<6x64xf32> to vector<5x64xf32>
    %59 = arith.maximumf %57, %58 : vector<5x64xf32>
    %60 = tpu.iota {dimensions = array<i32: 0>} : vector<5x64xi32>
    %c1_i32 = arith.constant 1 : i32
    %61 = vector.broadcast %c1_i32 : i32 to vector<5x64xi32>
    %62 = arith.andi %60, %61 : vector<5x64xi32>
    %c0_i32_19 = arith.constant 0 : i32
    %63 = vector.broadcast %c0_i32_19 : i32 to vector<5x64xi32>
    %64 = arith.cmpi eq, %62, %63 : vector<5x64xi32>
    %c4_i32 = arith.constant 4 : i32
    %65 = vector.broadcast %c4_i32 : i32 to vector<5x64xi32>
    %66 = arith.cmpi sle, %60, %65 : vector<5x64xi32>
    %67 = arith.andi %64, %66 : vector<5x64xi1>
    %cst_20 = arith.constant 0.000000e+00 : f32
    %68 = vector.broadcast %cst_20 : f32 to vector<5x64xf32>
    %69 = arith.select %67, %59, %68 : vector<5x64xi1>, vector<5x64xf32>
    %cst_21 = arith.constant dense<0.000000e+00> : vector<64xf32>
    %70 = vector.multi_reduction <add>, %69, %cst_21 [0] : vector<5x64xf32> to vector<64xf32>
    %71 = vector.shape_cast %70 : vector<64xf32> to vector<1x64xf32>
    %cst_22 = arith.constant 0.333333343 : f32
    %72 = vector.broadcast %cst_22 : f32 to vector<1x64xf32>
    %73 = arith.mulf %71, %72 : vector<1x64xf32>
    %c24_23 = arith.constant 24 : index
    %c0_24 = arith.constant 0 : index
    %74 = vector.load %arg0[%c24_23, %c0_24] : memref<56x4xf32, #tpu.memory_space<vmem>>, vector<1x4xf32>
    %c40 = arith.constant 40 : index
    %c0_25 = arith.constant 0 : index
    %75 = vector.load %arg0[%c40, %c0_25] : memref<56x4xf32, #tpu.memory_space<vmem>>, vector<1x4xf32>
    %76 = tpu.concatenate %44, %74, %73, %75 in 1 : vector<1x128xf32>, vector<1x4xf32>, vector<1x64xf32>, vector<1x4xf32> -> vector<1x200xf32>
    %c56 = arith.constant 56 : index
    %c0_26 = arith.constant 0 : index
    %77 = vector.load %arg2[%c56, %c0_26] : memref<456x64xf32, #tpu.memory_space<vmem>>, vector<200x64xf32>
    %cst_27 = arith.constant dense<0.000000e+00> : vector<1x64xf32>
    %78 = tpu.matmul %76, %77, %cst_27 {dimension_numbers = #tpu.dot_dimension_numbers<[1], [0], [0], [1], [0, 0, 1, 1], [], []>} : vector<1x200xf32>, vector<200x64xf32>, vector<1x64xf32> -> vector<1x64xf32>
    %c256 = arith.constant 256 : index
    %c0_28 = arith.constant 0 : index
    %79 = vector.load %arg2[%c256, %c0_28] : memref<456x64xf32, #tpu.memory_space<vmem>>, vector<1x64xf32>
    %80 = arith.addf %78, %79 : vector<1x64xf32>
    %cst_29 = arith.constant 0.000000e+00 : f32
    %81 = vector.broadcast %cst_29 : f32 to vector<1x64xf32>
    %82 = arith.maximumf %80, %81 : vector<1x64xf32>
    %c48_30 = arith.constant 48 : index
    %c0_31 = arith.constant 0 : index
    %83 = vector.load %arg0[%c48_30, %c0_31] : memref<56x4xf32, #tpu.memory_space<vmem>>, vector<1x4xf32>
    %84 = tpu.concatenate %82, %83 in 1 : vector<1x64xf32>, vector<1x4xf32> -> vector<1x68xf32>
    %c264 = arith.constant 264 : index
    %c0_32 = arith.constant 0 : index
    %85 = vector.load %arg2[%c264, %c0_32] : memref<456x64xf32, #tpu.memory_space<vmem>>, vector<68x64xf32>
    %cst_33 = arith.constant dense<0.000000e+00> : vector<1x64xf32>
    %86 = tpu.matmul %84, %85, %cst_33 {dimension_numbers = #tpu.dot_dimension_numbers<[1], [0], [0], [1], [0, 0, 1, 1], [], []>} : vector<1x68xf32>, vector<68x64xf32>, vector<1x64xf32> -> vector<1x64xf32>
    %c336 = arith.constant 336 : index
    %c0_34 = arith.constant 0 : index
    %87 = vector.load %arg2[%c336, %c0_34] : memref<456x64xf32, #tpu.memory_space<vmem>>, vector<1x64xf32>
    %88 = arith.addf %86, %87 : vector<1x64xf32>
    %cst_35 = arith.constant 0.000000e+00 : f32
    %89 = vector.broadcast %cst_35 : f32 to vector<1x64xf32>
    %90 = arith.maximumf %88, %89 : vector<1x64xf32>
    %c344 = arith.constant 344 : index
    %c0_36 = arith.constant 0 : index
    %91 = vector.load %arg2[%c344, %c0_36] : memref<456x64xf32, #tpu.memory_space<vmem>>, vector<64x32xf32>
    %cst_37 = arith.constant dense<0.000000e+00> : vector<1x32xf32>
    %92 = tpu.matmul %90, %91, %cst_37 {dimension_numbers = #tpu.dot_dimension_numbers<[1], [0], [0], [1], [0, 0, 1, 1], [], []>} : vector<1x64xf32>, vector<64x32xf32>, vector<1x32xf32> -> vector<1x32xf32>
    %c408 = arith.constant 408 : index
    %c0_38 = arith.constant 0 : index
    %93 = vector.load %arg2[%c408, %c0_38] : memref<456x64xf32, #tpu.memory_space<vmem>>, vector<1x32xf32>
    %94 = arith.addf %92, %93 : vector<1x32xf32>
    %cst_39 = arith.constant 0.000000e+00 : f32
    %95 = vector.broadcast %cst_39 : f32 to vector<1x32xf32>
    %96 = arith.maximumf %94, %95 : vector<1x32xf32>
    %c416 = arith.constant 416 : index
    %c0_40 = arith.constant 0 : index
    %97 = vector.load %arg2[%c416, %c0_40] : memref<456x64xf32, #tpu.memory_space<vmem>>, vector<32x6xf32>
    %cst_41 = arith.constant dense<0.000000e+00> : vector<1x6xf32>
    %98 = tpu.matmul %96, %97, %cst_41 {dimension_numbers = #tpu.dot_dimension_numbers<[1], [0], [0], [1], [0, 0, 1, 1], [], []>} : vector<1x32xf32>, vector<32x6xf32>, vector<1x6xf32> -> vector<1x6xf32>
    %c448 = arith.constant 448 : index
    %c0_42 = arith.constant 0 : index
    %99 = vector.load %arg2[%c448, %c0_42] : memref<456x64xf32, #tpu.memory_space<vmem>>, vector<1x6xf32>
    %100 = arith.addf %98, %99 : vector<1x6xf32>
    %101 = vector.extract_strided_slice %100 {offsets = [0, 0], sizes = [1, 3], strides = [1, 1]} : vector<1x6xf32> to vector<1x3xf32>
    %cst_43 = arith.constant dense<0xFF800000> : vector<1xf32>
    %102 = vector.multi_reduction <maximumf>, %101, %cst_43 [1] : vector<1x3xf32> to vector<1xf32>
    %103 = vector.shape_cast %102 : vector<1xf32> to vector<1x1xf32>
    %104 = vector.broadcast %103 : vector<1x1xf32> to vector<1x3xf32>
    %105 = arith.subf %101, %104 : vector<1x3xf32>
    %106 = math.exp %105 : vector<1x3xf32>
    %cst_44 = arith.constant dense<0.000000e+00> : vector<1xf32>
    %107 = vector.multi_reduction <add>, %106, %cst_44 [1] : vector<1x3xf32> to vector<1xf32>
    %108 = vector.shape_cast %107 : vector<1xf32> to vector<1x1xf32>
    %109 = tpu.reciprocal %108 {approx = true} : vector<1x1xf32> -> vector<1x1xf32>
    %110 = vector.broadcast %109 : vector<1x1xf32> to vector<1x3xf32>
    %111 = arith.mulf %106, %110 : vector<1x3xf32>
    %112 = vector.extract_strided_slice %100 {offsets = [0, 3], sizes = [1, 3], strides = [1, 1]} : vector<1x6xf32> to vector<1x3xf32>
    %cst_45 = arith.constant dense<0xFF800000> : vector<1xf32>
    %113 = vector.multi_reduction <maximumf>, %112, %cst_45 [1] : vector<1x3xf32> to vector<1xf32>
    %114 = vector.shape_cast %113 : vector<1xf32> to vector<1x1xf32>
    %115 = vector.broadcast %114 : vector<1x1xf32> to vector<1x3xf32>
    %116 = arith.subf %112, %115 : vector<1x3xf32>
    %117 = math.exp %116 : vector<1x3xf32>
    %cst_46 = arith.constant dense<0.000000e+00> : vector<1xf32>
    %118 = vector.multi_reduction <add>, %117, %cst_46 [1] : vector<1x3xf32> to vector<1xf32>
    %119 = vector.shape_cast %118 : vector<1xf32> to vector<1x1xf32>
    %120 = tpu.reciprocal %119 {approx = true} : vector<1x1xf32> -> vector<1x1xf32>
    %121 = vector.broadcast %120 : vector<1x1xf32> to vector<1x3xf32>
    %122 = arith.mulf %117, %121 : vector<1x3xf32>
    %123 = tpu.concatenate %111, %122 in 1 : vector<1x3xf32>, vector<1x3xf32> -> vector<1x6xf32>
    %c0_47 = arith.constant 0 : index
    %c0_48 = arith.constant 0 : index
    %124 = vector.load %arg3[%c0_47, %c0_48] : memref<1x6xf32, #tpu.memory_space<vmem>>, vector<1x6xf32>
    tpu.vector_store %arg3[%c0_47, %c0_48], %123 {strides = array<i32>} : memref<1x6xf32, #tpu.memory_space<vmem>>, vector<1x6xf32>,
    return
  }
}

</mosaic_0001>

<llo_original>
// kernel: forward.1
$region0: #{forward.1}
  #allocation0 [shape = 'u32[]', space=smem, size = 0x4, offset = 0x4, fixed_abs, tag = 'smem constant byte address 0x4 - core index']
  #allocation1 [shape = 'u32[144,128]{1,0:T(1,128)}', space=vmem, size = 0x12000, scoped, tag = 'internal scratch']
  %s0 = inlined_call_operand.vmem [shape: f32[56,4], index: 0, kind: input, shape index: {}]
  %s1 = inlined_call_operand.hbm [shape: f32[200,128], index: 1, kind: input, shape index: {}]
  %s2 = inlined_call_operand.hbm [shape: f32[456,64], index: 2, kind: input, shape index: {}]
  %s3 = inlined_call_operand.vmem [shape: f32[1,6], index: 3, kind: output, shape index: {}]
  %s4 = sld [smem:[#allocation0]]
  $region30: #{forward.1} parent=0
    _
  %s6 = ssub.s32 1, %s4
  %s7 = scalar_select 0, %s6, %s4
  $region1: #{forward.1} parent=0
    #allocation2 [shape = 'u8[102400]{0}', space=vmem, size = 0x19000, scoped, tag = 'input window, operand 1, single buffered']
    #allocation3 [shape = 's32[1]{0}', space=sflag, size = 0x4, scoped, tag = 'scoped memory for forward.1']
    #allocation4 [shape = 'u8[233472]{0}', space=vmem, size = 0x39000, scoped, tag = 'input window, operand 2, single buffered']
    #allocation5 [shape = 's32[1]{0}', space=sflag, size = 0x4, scoped, tag = 'scoped memory for forward.1']
    %8 = vsyncpa [#allocation3], 0
    %9 = vsyncpa [#allocation5], 0
    // Predicated region
    $region2: #{forward.1} parent=1 // pred_check
      _
    $region3: #{forward.1} parent=1 // pred_check_branch
      %11 = sbr.rel (0) target = $region5
    $region4: #{forward.1} parent=1 // pred_region
      _
    $region5: #{forward.1} parent=1 // pred_fallthru
      _
    // Predicated region
    $region6: #{forward.1} parent=1 // pred_check
      _
    $region7: #{forward.1} parent=1 // pred_check_branch
      %13 = sbr.rel (0) target = $region9
    $region8: #{forward.1} parent=1 // pred_region
      %s15 = ssub.s32 3200, 3200
      %16 = vsyncadd [#allocation3], %s15
      %s17 = sshll.u32 [#allocation2], 4
      %s18 = int_to_ptr.vmem [resolvable:$true] %s17
      %23 = dma.hbm_to_vmem [thread:$0]  %s1, 3200, %s18, [#allocation3], 128, 128, 8
    $region9: #{forward.1} parent=1 // pred_fallthru
      _
    // Predicated region
    $region10: #{forward.1} parent=1 // pred_check
      _
    $region11: #{forward.1} parent=1 // pred_check_branch
      %25 = sbr.rel (0) target = $region13
    $region12: #{forward.1} parent=1 // pred_region
      %s27 = ssub.s32 7296, 7296
      %28 = vsyncadd [#allocation5], %s27
      %s29 = sshll.u32 [#allocation4], 4
      %s30 = int_to_ptr.vmem [resolvable:$true] %s29
      %35 = dma.hbm_to_vmem [thread:$0]  %s2, 7296, %s30, [#allocation5], 128, 128, 8
    $region13: #{forward.1} parent=1 // pred_fallthru
      _
    // Predicated region
    $region14: #{forward.1} parent=1 // pred_check
      _
    $region15: #{forward.1} parent=1 // pred_check_branch
      %37 = sbr.rel (0) target = $region17
    $region16: #{forward.1} parent=1 // pred_region
      %38 = dma.done [#allocation3], 3200
    $region17: #{forward.1} parent=1 // pred_fallthru
      _
    // Predicated region
    $region18: #{forward.1} parent=1 // pred_check
      _
    $region19: #{forward.1} parent=1 // pred_check_branch
      %40 = sbr.rel (0) target = $region21
    $region20: #{forward.1} parent=1 // pred_region
      %41 = dma.done [#allocation5], 7296
    $region21: #{forward.1} parent=1 // pred_fallthru
      _
    %v42 = vld [vmem:[%s0] sm:$0xff]
    %v43 = vld [vmem:[%s0 + $0x8] sm:$0xff]
    %v44 = vld [vmem:[%s0 + $0x10] sm:$0xf]
    %vm48 = vcmask 1046528
    %v49 = vrot.slane %v42, 1
    %v50 = vrot.slane %v43, 1
    %v51 = vsel %vm48, %v49, %v50
    %v52 = vrot.slane %v44, 1
    %v53 = vsel %vm48, %v50, %v52
    %54 = vrot.lane.b32.xlu0 %v51, 4
    %v55 = vpop.permute.xlu0 %54
    %56 = vrot.lane.b32.xlu0 %v53, 4
    %v57 = vpop.permute.xlu0 %56
    %vm60 = vcmask 1045504
    %v61 = vrot.slane %v42, 2
    %v62 = vrot.slane %v43, 2
    %v63 = vsel %vm60, %v61, %v62
    %v64 = vrot.slane %v44, 2
    %v65 = vsel %vm60, %v62, %v64
    %66 = vrot.lane.b32.xlu0 %v63, 8
    %v67 = vpop.permute.xlu0 %66
    %68 = vrot.lane.b32.xlu0 %v65, 8
    %v69 = vpop.permute.xlu0 %68
    %vm72 = vcmask 1044480
    %v73 = vrot.slane %v42, 3
    %v74 = vrot.slane %v43, 3
    %v75 = vsel %vm72, %v73, %v74
    %v76 = vrot.slane %v44, 3
    %v77 = vsel %vm72, %v74, %v76
    %78 = vrot.lane.b32.xlu0 %v75, 12
    %v79 = vpop.permute.xlu0 %78
    %80 = vrot.lane.b32.xlu0 %v77, 12
    %v81 = vpop.permute.xlu0 %80
    %vm84 = vcmask 1043456
    %v85 = vrot.slane %v42, 4
    %v86 = vrot.slane %v43, 4
    %v87 = vsel %vm84, %v85, %v86
    %v88 = vrot.slane %v44, 4
    %v89 = vsel %vm84, %v86, %v88
    %90 = vrot.lane.b32.xlu0 %v87, 16
    %v91 = vpop.permute.xlu0 %90
    %92 = vrot.lane.b32.xlu0 %v89, 16
    %v93 = vpop.permute.xlu0 %92
    %vm96 = vcmask 31744
    %v97 = vsel %vm96, %v42, %v55
    %v98 = vsel %vm96, %v43, %v57
    %vm99 = vcmask 64512
    %v100 = vsel %vm99, %v97, %v67
    %v101 = vsel %vm99, %v98, %v69
    %vm102 = vcmask 97280
    %v103 = vsel %vm102, %v100, %v79
    %v104 = vsel %vm102, %v101, %v81
    %vm105 = vcmask 130048
    %v106 = vsel %vm105, %v103, %v91
    %v107 = vsel %vm105, %v104, %v93
    %v108 = vld [vmem:[#allocation4] sm:$0xff]
    %v109 = vld [vmem:[#allocation4 + $0x8] sm:$0xff]
    %v110 = vld [vmem:[#allocation4 + $0x10] sm:$0xf]
    %v111 = vld [vmem:[#allocation4 + $0x18] sm:$0x1]
    %v112 = vlaneseq
    %v113 = vshrl.u32 %v112, 7
    %v114 = vsub.s32 0, %v113
    %v115 = vrot.slane %v111, %v114
    %vm116 = vcmask 162816
    %v118 = vsel %vm116, %v106, 0
    %v121 = vsel %vm116, %v107, 0
    %v124 = vsel %vm84, %v110, 0
    %126 = vmatprep.subr.mxu0 0.0
    %127 = vmatpush1.msra.mxu0 %v108
    %128 = vmatprep.subr.mxu0 0.0
    %129 = vmatpush1.msra.mxu0 %v109
    %130 = vmatprep.subr.mxu0 0.0
    %131 = vmatpush1.msra.mxu0 %v124
    %132 = vmatprep.subr.mxu0 0.0
    %133 = vmatpush1.msra.mxu0 0.0
    %134 = vmatprep.subr.mxu0 0.0
    %135 = vmatpush1.msra.mxu0 0.0
    %136 = vmatprep.subr.mxu0 0.0
    %137 = vmatpush1.msra.mxu0 0.0
    %138 = vmatprep.subr.mxu0 0.0
    %139 = vmatpush1.msra.mxu0 0.0
    %140 = vmatprep.subr.mxu0 0.0
    %141 = vmatpush1.msra.mxu0 0.0
    %142 = vmatprep.subr.mxu0 0.0
    %143 = vmatpush1.msra.mxu0 0.0
    %144 = vmatprep.subr.mxu0 0.0
    %145 = vmatpush1.msra.mxu0 0.0
    %146 = vmatprep.subr.mxu0 0.0
    %147 = vmatpush1.msra.mxu0 0.0
    %148 = vmatprep.subr.mxu0 0.0
    %149 = vmatpush1.msra.mxu0 0.0
    %150 = vmatprep.subr.mxu0 0.0
    %151 = vmatpush1.msra.mxu0 0.0
    %152 = vmatprep.subr.mxu0 0.0
    %153 = vmatpush1.msra.mxu0 0.0
    %154 = vmatprep.subr.mxu0 0.0
    %155 = vmatpush1.msra.mxu0 0.0
    %156 = vmatprep.subr.mxu0 0.0
    %157 = vmatpush1.msra.mxu0 0.0
    %158 = vmatprep.subr.mxu0 0.0
    %159 = vmatpush1.msra.mxu0 0.0
    %160 = vmatprep.subr.mxu0 0.0
    %161 = vmatpush1.msra.mxu0 0.0
    %162 = vmatprep.subr.mxu0 0.0
    %163 = vmatpush1.msra.mxu0 0.0
    %164 = vmatprep.subr.mxu0 0.0
    %165 = vmatpush1.msra.mxu0 0.0
    %166 = vmatprep.subr.mxu0 0.0
    %167 = vmatpush1.msra.mxu0 0.0
    %168 = vmatprep.subr.mxu0 0.0
    %169 = vmatpush1.msra.mxu0 0.0
    %170 = vmatprep.subr.mxu0 0.0
    %171 = vmatpush1.msra.mxu0 0.0
    %172 = vmatprep.subr.mxu0 0.0
    %173 = vmatpush1.msra.mxu0 0.0
    %174 = vmatprep.subr.mxu0 0.0
    %175 = vmatpush1.msra.mxu0 0.0
    %176 = vmatprep.subr.mxu0 0.0
    %177 = vmatpush1.msra.mxu0 0.0
    %178 = vmatprep.subr.mxu0 0.0
    %179 = vmatpush1.msra.mxu0 0.0
    %180 = vmatprep.subr.mxu0 0.0
    %181 = vmatpush1.msra.mxu0 0.0
    %182 = vmatprep.subr.mxu0 0.0
    %183 = vmatpush1.msra.mxu0 0.0
    %184 = vmatprep.subr.mxu0 0.0
    %185 = vmatpush1.msra.mxu0 0.0
    %186 = vmatprep.subr.mxu0 0.0
    %187 = vmatpush1.msra.mxu0 0.0
    %188 = vmatprep.subr.mxu0 0.0
    %189 = vmatpush1.msra.mxu0 0.0
    %190 = vmatprep.mubr.f32.mxu0 0.0
    %191 = vmatmul.mubr.f32.gmra.mrb[0].mxu0 %v118
    %v192 = vpop.f32.mrb[0].mxu0
    %v193 = vadd.f32 %v115, %v192
    %v194 = vpop.f32.mrb[0].mxu0
    %195 = vmatprep.mubr.f32.mxu0 0.0
    %196 = vmatmul.mubr.f32.gmra.mrb[0].mxu0 %v121
    %v197 = vpop.f32.mrb[0].mxu0
    %v198 = vadd.f32 %v115, %v197
    %v199 = vpop.f32.mrb[0].mxu0
    %200 = vdwg.mxu0
    %v201 = vmax.f32 %v193, 0.0
    %v202 = vmax.f32 %v198, 0.0
    %v205 = vrot.slane %v201, 1
    %v206 = vrot.slane %v202, 1
    %v207 = vsel %vm48, %v205, %v206
    %v210 = vmax.f32 %v201, %v207
    %v211 = vmax.f32 %v202, %v206
    %v214 = vrot.slane %v210, 2
    %v215 = vrot.slane %v211, 2
    %v216 = vsel %vm60, %v214, %v215
    %217 = vrot.lane.b32.xlu0 %v216, 64
    %v218 = vpop.permute.xlu0 %217
    %219 = vrot.lane.b32.xlu0 %v215, 64
    %v220 = vpop.permute.xlu0 %219
    %v223 = vrot.slane %v210, 4
    %v224 = vrot.slane %v211, 4
    %v225 = vsel %vm84, %v223, %v224
    %vm226 = vcmask 523264
    %v227 = vsel %vm226, %v210, %v218
    %v228 = vsel %vm226, %v211, %v220
    %v229 = vld [vmem:[#allocation2] sm:$0xff]
    %v230 = vld [vmem:[#allocation2 + $0x8] sm:$0xff]
    %v231 = vld [vmem:[#allocation2 + $0x10] sm:$0xff]
    %v232 = vld [vmem:[#allocation2 + $0x18] sm:$0xff]
    %v233 = vld [vmem:[#allocation2 + $0x20] sm:$0xff]
    %v234 = vld [vmem:[#allocation2 + $0x28] sm:$0xff]
    %v235 = vld [vmem:[#allocation2 + $0x30] sm:$0xff]
    %v236 = vld [vmem:[#allocation2 + $0x38] sm:$0xff]
    %v237 = vld [vmem:[#allocation2 + $0x40] sm:$0xff]
    %v238 = vld [vmem:[#allocation2 + $0x48] sm:$0xff]
    %v239 = vld [vmem:[#allocation2 + $0x50] sm:$0xff]
    %v240 = vld [vmem:[#allocation2 + $0x58] sm:$0xff]
    %v241 = vld [vmem:[#allocation2 + $0x60] sm:$0xff]
    %v242 = vld [vmem:[#allocation2 + $0x68] sm:$0xff]
    %v243 = vld [vmem:[#allocation2 + $0x70] sm:$0xff]
    %v244 = vld [vmem:[#allocation2 + $0x78] sm:$0xff]
    %v245 = vld [vmem:[#allocation2 + $0x80] sm:$0xff]
    %v246 = vld [vmem:[#allocation2 + $0x88] sm:$0xff]
    %v247 = vld [vmem:[#allocation2 + $0x90] sm:$0xff]
    %v248 = vld [vmem:[#allocation2 + $0x98] sm:$0xff]
    %v249 = vld [vmem:[#allocation2 + $0xa0] sm:$0xff]
    %v250 = vld [vmem:[#allocation2 + $0xa8] sm:$0xff]
    %v251 = vld [vmem:[#allocation2 + $0xb0] sm:$0xff]
    %v252 = vld [vmem:[#allocation2 + $0xb8] sm:$0xff]
    %v253 = vld [vmem:[#allocation2 + $0xc0] sm:$0x1]
    %v254 = vlaneseq
    %v255 = vshrl.u32 %v254, 7
    %v256 = vsub.s32 0, %v255
    %v257 = vrot.slane %v253, %v256
    %v258 = vsel %vm226, %v225, 0
    %v260 = vsel %vm226, %v224, 0
    %262 = vmatprep.subr.mxu0 0.0
    %263 = vmatpush1.msra.mxu0 %v229
    %264 = vmatprep.subr.mxu0 0.0
    %265 = vmatpush1.msra.mxu0 %v230
    %266 = vmatprep.subr.mxu0 0.0
    %267 = vmatpush1.msra.mxu0 %v231
    %268 = vmatprep.subr.mxu0 0.0
    %269 = vmatpush1.msra.mxu0 %v232
    %270 = vmatprep.subr.mxu0 0.0
    %271 = vmatpush1.msra.mxu0 %v233
    %272 = vmatprep.subr.mxu0 0.0
    %273 = vmatpush1.msra.mxu0 %v234
    %274 = vmatprep.subr.mxu0 0.0
    %275 = vmatpush1.msra.mxu0 %v235
    %276 = vmatprep.subr.mxu0 0.0
    %277 = vmatpush1.msra.mxu0 %v236
    %278 = vmatprep.subr.mxu0 0.0
    %279 = vmatpush1.msra.mxu0 %v237
    %280 = vmatprep.subr.mxu0 0.0
    %281 = vmatpush1.msra.mxu0 %v238
    %282 = vmatprep.subr.mxu0 0.0
    %283 = vmatpush1.msra.mxu0 %v239
    %284 = vmatprep.subr.mxu0 0.0
    %285 = vmatpush1.msra.mxu0 %v240
    %286 = vmatprep.subr.mxu0 0.0
    %287 = vmatpush1.msra.mxu0 %v241
    %288 = vmatprep.subr.mxu0 0.0
    %289 = vmatpush1.msra.mxu0 %v242
    %290 = vmatprep.subr.mxu0 0.0
    %291 = vmatpush1.msra.mxu0 %v243
    %292 = vmatprep.subr.mxu0 0.0
    %293 = vmatpush1.msra.mxu0 %v244
    %294 = vmatprep.subr.mxu0 0.0
    %295 = vmatpush1.msra.mxu0 %v245
    %296 = vmatprep.subr.mxu0 0.0
    %297 = vmatpush1.msra.mxu0 %v246
    %298 = vmatprep.subr.mxu0 0.0
    %299 = vmatpush1.msra.mxu0 %v247
    %300 = vmatprep.subr.mxu0 0.0
    %301 = vmatpush1.msra.mxu0 %v248
    %302 = vmatprep.subr.mxu0 0.0
    %303 = vmatpush1.msra.mxu0 %v249
    %304 = vmatprep.subr.mxu0 0.0
    %305 = vmatpush1.msra.mxu0 %v250
    %306 = vmatprep.subr.mxu0 0.0
    %307 = vmatpush1.msra.mxu0 %v251
    %308 = vmatprep.subr.mxu0 0.0
    %309 = vmatpush1.msra.mxu0 %v252
    %310 = vmatprep.subr.mxu0 0.0
    %311 = vmatpush1.msra.mxu0 0.0
    %312 = vmatprep.subr.mxu0 0.0
    %313 = vmatpush1.msra.mxu0 0.0
    %314 = vmatprep.subr.mxu0 0.0
    %315 = vmatpush1.msra.mxu0 0.0
    %316 = vmatprep.subr.mxu0 0.0
    %317 = vmatpush1.msra.mxu0 0.0
    %318 = vmatprep.subr.mxu0 0.0
    %319 = vmatpush1.msra.mxu0 0.0
    %320 = vmatprep.subr.mxu0 0.0
    %321 = vmatpush1.msra.mxu0 0.0
    %322 = vmatprep.subr.mxu0 0.0
    %323 = vmatpush1.msra.mxu0 0.0
    %324 = vmatprep.subr.mxu0 0.0
    %325 = vmatpush1.msra.mxu0 0.0
    %326 = vmatprep.mubr.f32.mxu0 %v258
    %327 = vmatmul.mubr.f32.gmra.mrb[0].mxu0 %v227
    %v328 = vpop.f32.mrb[0].mxu0
    %v329 = vadd.f32 %v257, %v328
    %v330 = vpop.f32.mrb[0].mxu0
    %331 = vmatprep.mubr.f32.mxu0 %v260
    %332 = vmatmul.mubr.f32.gmra.mrb[0].mxu0 %v228
    %v333 = vpop.f32.mrb[0].mxu0
    %v334 = vadd.f32 %v257, %v333
    %v335 = vpop.f32.mrb[0].mxu0
    %336 = vdwg.mxu0
    %v337 = vmax.f32 %v329, 0.0
    %v338 = vmax.f32 %v334, 0.0
    %v341 = vrot.slane %v337, 2
    %v342 = vrot.slane %v338, 2
    %v343 = vsel %vm60, %v341, %v342
    %v346 = vmax.f32 %v337, %v343
    %v347 = vmax.f32 %v338, %v342
    %v348 = vlaneseq
    %v349 = vshrl.u32 %v348, 7
    %v350 = vadd.s32 %v349, 8
    %v351 = vand.u32 %v349, 3
    %v352 = vand.u32 %v350, 3
    %vm353 = vcmp.eq.s32.totalorder %v351, 0
    %vm354 = vcmp.eq.s32.totalorder %v352, 0
    %vm355 = vcmp.le.s32.totalorder %v349, 8
    %vm356 = vcmp.le.s32.totalorder %v350, 8
    %vm357 = vmand %vm353, %vm355
    %vm358 = vmand %vm354, %vm356
    %v359 = vsel %vm357, %v346, 0.0
    %v360 = vsel %vm358, %v347, 0.0
    %vm361 = vcmask 1040384
    %v362 = vsel %vm361, %v360, 0.0
    %v363 = vadd.f32 %v359, %v362
    %v364 = vrot.slane %v363, 4
    %v365 = vadd.f32 %v363, %v364
    %v366 = vrot.slane %v365, 2
    %v367 = vadd.f32 %v365, %v366
    %v368 = vrot.slane %v367, 1
    %v369 = vadd.f32 %v367, %v368
    %v370 = vmul.f32 %v369, 0.33333334
    %v371 = vld [vmem:[%s0 + $0x20] sm:$0xff]
    %v373 = vrot.slane %v371, 1
    %374 = vrot.lane.b32.xlu0 %v373, 4
    %v375 = vpop.permute.xlu0 %374
    %v377 = vrot.slane %v371, 2
    %378 = vrot.lane.b32.xlu0 %v377, 8
    %v379 = vpop.permute.xlu0 %378
    %v381 = vsel %vm96, %v371, %v375
    %v382 = vsel %vm99, %v381, %v379
    %v383 = vld [vmem:[#allocation4 + $0x20] sm:$0xff]
    %v384 = vld [vmem:[#allocation4 + $0x28] sm:$0xf]
    %v385 = vld [vmem:[#allocation4 + $0x30] sm:$0x1]
    %v386 = vlaneseq
    %v387 = vshrl.u32 %v386, 7
    %v388 = vsub.s32 0, %v387
    %v389 = vrot.slane %v385, %v388
    %v391 = vsel %vm102, %v382, 0
    %v394 = vsel %vm84, %v384, 0
    %396 = vmatprep.subr.mxu0 0.0
    %397 = vmatpush1.msra.mxu0 %v383
    %398 = vmatprep.subr.mxu0 0.0
    %399 = vmatpush1.msra.mxu0 %v394
    %400 = vmatprep.subr.mxu0 0.0
    %401 = vmatpush1.msra.mxu0 0.0
    %402 = vmatprep.subr.mxu0 0.0
    %403 = vmatpush1.msra.mxu0 0.0
    %404 = vmatprep.subr.mxu0 0.0
    %405 = vmatpush1.msra.mxu0 0.0
    %406 = vmatprep.subr.mxu0 0.0
    %407 = vmatpush1.msra.mxu0 0.0
    %408 = vmatprep.subr.mxu0 0.0
    %409 = vmatpush1.msra.mxu0 0.0
    %410 = vmatprep.subr.mxu0 0.0
    %411 = vmatpush1.msra.mxu0 0.0
    %412 = vmatprep.subr.mxu0 0.0
    %413 = vmatpush1.msra.mxu0 0.0
    %414 = vmatprep.subr.mxu0 0.0
    %415 = vmatpush1.msra.mxu0 0.0
    %416 = vmatprep.subr.mxu0 0.0
    %417 = vmatpush1.msra.mxu0 0.0
    %418 = vmatprep.subr.mxu0 0.0
    %419 = vmatpush1.msra.mxu0 0.0
    %420 = vmatprep.subr.mxu0 0.0
    %421 = vmatpush1.msra.mxu0 0.0
    %422 = vmatprep.subr.mxu0 0.0
    %423 = vmatpush1.msra.mxu0 0.0
    %424 = vmatprep.subr.mxu0 0.0
    %425 = vmatpush1.msra.mxu0 0.0
    %426 = vmatprep.subr.mxu0 0.0
    %427 = vmatpush1.msra.mxu0 0.0
    %428 = vmatprep.subr.mxu0 0.0
    %429 = vmatpush1.msra.mxu0 0.0
    %430 = vmatprep.subr.mxu0 0.0
    %431 = vmatpush1.msra.mxu0 0.0
    %432 = vmatprep.subr.mxu0 0.0
    %433 = vmatpush1.msra.mxu0 0.0
    %434 = vmatprep.subr.mxu0 0.0
    %435 = vmatpush1.msra.mxu0 0.0
    %436 = vmatprep.subr.mxu0 0.0
    %437 = vmatpush1.msra.mxu0 0.0
    %438 = vmatprep.subr.mxu0 0.0
    %439 = vmatpush1.msra.mxu0 0.0
    %440 = vmatprep.subr.mxu0 0.0
    %441 = vmatpush1.msra.mxu0 0.0
    %442 = vmatprep.subr.mxu0 0.0
    %443 = vmatpush1.msra.mxu0 0.0
    %444 = vmatprep.subr.mxu0 0.0
    %445 = vmatpush1.msra.mxu0 0.0
    %446 = vmatprep.subr.mxu0 0.0
    %447 = vmatpush1.msra.mxu0 0.0
    %448 = vmatprep.subr.mxu0 0.0
    %449 = vmatpush1.msra.mxu0 0.0
    %450 = vmatprep.subr.mxu0 0.0
    %451 = vmatpush1.msra.mxu0 0.0
    %452 = vmatprep.subr.mxu0 0.0
    %453 = vmatpush1.msra.mxu0 0.0
    %454 = vmatprep.subr.mxu0 0.0
    %455 = vmatpush1.msra.mxu0 0.0
    %456 = vmatprep.subr.mxu0 0.0
    %457 = vmatpush1.msra.mxu0 0.0
    %458 = vmatprep.subr.mxu0 0.0
    %459 = vmatpush1.msra.mxu0 0.0
    %460 = vmatprep.mubr.f32.mxu0 0.0
    %461 = vmatmul.mubr.f32.gmra.mrb[0].mxu0 %v391
    %v462 = vpop.f32.mrb[0].mxu0
    %v463 = vadd.f32 %v389, %v462
    %v464 = vpop.f32.mrb[0].mxu0
    %465 = vdwg.mxu0
    %v466 = vmax.f32 %v463, 0.0
    %v468 = vrot.slane %v466, 1
    %v470 = vmax.f32 %v466, %v468
    %v471 = vand.u32 %v349, 1
    %vm472 = vcmp.eq.s32.totalorder %v471, 0
    %vm473 = vcmp.le.s32.totalorder %v349, 4
    %vm474 = vmand %vm472, %vm473
    %v475 = vsel %vm474, %v470, 0.0
    %vm476 = vcmask 520192
    %v477 = vsel %vm476, %v475, 0.0
    %v478 = vrot.slane %v477, 4
    %v479 = vadd.f32 %v477, %v478
    %v480 = vrot.slane %v479, 2
    %v481 = vadd.f32 %v479, %v480
    %v482 = vrot.slane %v481, 1
    %v483 = vadd.f32 %v481, %v482
    %v484 = vmul.f32 %v483, 0.33333334
    %v485 = vld [vmem:[%s0 + $0x18] sm:$0x1]
    %v486 = vld [vmem:[%s0 + $0x28] sm:$0x1]
    %488 = vrot.lane.b32.xlu0 %v484, 4
    %v489 = vpop.permute.xlu0 %488
    %492 = vrot.lane.b32.xlu0 %v486, 68
    %v493 = vpop.permute.xlu0 %492
    %v495 = vsel %vm96, %v485, %v489
    %vm496 = vcmask 556032
    %v497 = vsel %vm496, %v495, %v493
    %v498 = vld [vmem:[#allocation4 + $0x38] sm:$0xff]
    %v499 = vld [vmem:[#allocation4 + $0x40] sm:$0xff]
    %v500 = vld [vmem:[#allocation4 + $0x48] sm:$0xff]
    %v501 = vld [vmem:[#allocation4 + $0x50] sm:$0xff]
    %v502 = vld [vmem:[#allocation4 + $0x58] sm:$0xff]
    %v503 = vld [vmem:[#allocation4 + $0x60] sm:$0xff]
    %v504 = vld [vmem:[#allocation4 + $0x68] sm:$0xff]
    %v505 = vld [vmem:[#allocation4 + $0x70] sm:$0xff]
    %v506 = vld [vmem:[#allocation4 + $0x78] sm:$0xff]
    %v507 = vld [vmem:[#allocation4 + $0x80] sm:$0xff]
    %v508 = vld [vmem:[#allocation4 + $0x88] sm:$0xff]
    %v509 = vld [vmem:[#allocation4 + $0x90] sm:$0xff]
    %v510 = vld [vmem:[#allocation4 + $0x98] sm:$0xff]
    %v511 = vld [vmem:[#allocation4 + $0xa0] sm:$0xff]
    %v512 = vld [vmem:[#allocation4 + $0xa8] sm:$0xff]
    %v513 = vld [vmem:[#allocation4 + $0xb0] sm:$0xff]
    %v514 = vld [vmem:[#allocation4 + $0xb8] sm:$0xff]
    %v515 = vld [vmem:[#allocation4 + $0xc0] sm:$0xff]
    %v516 = vld [vmem:[#allocation4 + $0xc8] sm:$0xff]
    %v517 = vld [vmem:[#allocation4 + $0xd0] sm:$0xff]
    %v518 = vld [vmem:[#allocation4 + $0xd8] sm:$0xff]
    %v519 = vld [vmem:[#allocation4 + $0xe0] sm:$0xff]
    %v520 = vld [vmem:[#allocation4 + $0xe8] sm:$0xff]
    %v521 = vld [vmem:[#allocation4 + $0xf0] sm:$0xff]
    %v522 = vld [vmem:[#allocation4 + $0xf8] sm:$0xff]
    %v523 = vld [vmem:[#allocation4 + $0x100] sm:$0x1]
    %vm524 = vcmask 588800
    %v526 = vsel %vm524, %v497, 0
    %528 = vmatprep.subr.mxu0 0.0
    %529 = vmatpush1.msra.mxu0 %v498
    %530 = vmatprep.subr.mxu0 0.0
    %531 = vmatpush1.msra.mxu0 %v499
    %532 = vmatprep.subr.mxu0 0.0
    %533 = vmatpush1.msra.mxu0 %v500
    %534 = vmatprep.subr.mxu0 0.0
    %535 = vmatpush1.msra.mxu0 %v501
    %536 = vmatprep.subr.mxu0 0.0
    %537 = vmatpush1.msra.mxu0 %v502
    %538 = vmatprep.subr.mxu0 0.0
    %539 = vmatpush1.msra.mxu0 %v503
    %540 = vmatprep.subr.mxu0 0.0
    %541 = vmatpush1.msra.mxu0 %v504
    %542 = vmatprep.subr.mxu0 0.0
    %543 = vmatpush1.msra.mxu0 %v505
    %544 = vmatprep.subr.mxu0 0.0
    %545 = vmatpush1.msra.mxu0 %v506
    %546 = vmatprep.subr.mxu0 0.0
    %547 = vmatpush1.msra.mxu0 %v507
    %548 = vmatprep.subr.mxu0 0.0
    %549 = vmatpush1.msra.mxu0 %v508
    %550 = vmatprep.subr.mxu0 0.0
    %551 = vmatpush1.msra.mxu0 %v509
    %552 = vmatprep.subr.mxu0 0.0
    %553 = vmatpush1.msra.mxu0 %v510
    %554 = vmatprep.subr.mxu0 0.0
    %555 = vmatpush1.msra.mxu0 %v511
    %556 = vmatprep.subr.mxu0 0.0
    %557 = vmatpush1.msra.mxu0 %v512
    %558 = vmatprep.subr.mxu0 0.0
    %559 = vmatpush1.msra.mxu0 %v513
    %560 = vmatprep.subr.mxu0 0.0
    %561 = vmatpush1.msra.mxu0 %v514
    %562 = vmatprep.subr.mxu0 0.0
    %563 = vmatpush1.msra.mxu0 %v515
    %564 = vmatprep.subr.mxu0 0.0
    %565 = vmatpush1.msra.mxu0 %v516
    %566 = vmatprep.subr.mxu0 0.0
    %567 = vmatpush1.msra.mxu0 %v517
    %568 = vmatprep.subr.mxu0 0.0
    %569 = vmatpush1.msra.mxu0 %v518
    %570 = vmatprep.subr.mxu0 0.0
    %571 = vmatpush1.msra.mxu0 %v519
    %572 = vmatprep.subr.mxu0 0.0
    %573 = vmatpush1.msra.mxu0 %v520
    %574 = vmatprep.subr.mxu0 0.0
    %575 = vmatpush1.msra.mxu0 %v521
    %576 = vmatprep.subr.mxu0 0.0
    %577 = vmatpush1.msra.mxu0 %v522
    %578 = vmatprep.subr.mxu0 0.0
    %579 = vmatpush1.msra.mxu0 0.0
    %580 = vmatprep.subr.mxu0 0.0
    %581 = vmatpush1.msra.mxu0 0.0
    %582 = vmatprep.subr.mxu0 0.0
    %583 = vmatpush1.msra.mxu0 0.0
    %584 = vmatprep.subr.mxu0 0.0
    %585 = vmatpush1.msra.mxu0 0.0
    %586 = vmatprep.subr.mxu0 0.0
    %587 = vmatpush1.msra.mxu0 0.0
    %588 = vmatprep.subr.mxu0 0.0
    %589 = vmatpush1.msra.mxu0 0.0
    %590 = vmatprep.subr.mxu0 0.0
    %591 = vmatpush1.msra.mxu0 0.0
    %592 = vmatprep.mubr.f32.mxu0 %v526
    %593 = vmatmul.mubr.f32.gmra.mrb[0].mxu0 %v370
    %v594 = vpop.f32.mrb[0].mxu0
    %v595 = vadd.f32 %v523, %v594
    %v596 = vpop.f32.mrb[0].mxu0
    %597 = vdwg.mxu0
    %v598 = vmax.f32 %v595, 0.0
    %v599 = vld [vmem:[%s0 + $0x30] sm:$0x1]
    %601 = vrot.lane.b32.xlu0 %v599, 64
    %v602 = vpop.permute.xlu0 %601
    %v604 = vsel %vm226, %v598, %v602
    %v605 = vld [vmem:[#allocation4 + $0x108] sm:$0xff]
    %v606 = vld [vmem:[#allocation4 + $0x110] sm:$0xff]
    %v607 = vld [vmem:[#allocation4 + $0x118] sm:$0xff]
    %v608 = vld [vmem:[#allocation4 + $0x120] sm:$0xff]
    %v609 = vld [vmem:[#allocation4 + $0x128] sm:$0xff]
    %v610 = vld [vmem:[#allocation4 + $0x130] sm:$0xff]
    %v611 = vld [vmem:[#allocation4 + $0x138] sm:$0xff]
    %v612 = vld [vmem:[#allocation4 + $0x140] sm:$0xff]
    %v613 = vld [vmem:[#allocation4 + $0x148] sm:$0xf]
    %v614 = vld [vmem:[#allocation4 + $0x150] sm:$0x1]
    %v616 = vsel %vm496, %v604, 0
    %v619 = vsel %vm84, %v613, 0
    %621 = vmatprep.subr.mxu0 0.0
    %622 = vmatpush1.msra.mxu0 %v605
    %623 = vmatprep.subr.mxu0 0.0
    %624 = vmatpush1.msra.mxu0 %v606
    %625 = vmatprep.subr.mxu0 0.0
    %626 = vmatpush1.msra.mxu0 %v607
    %627 = vmatprep.subr.mxu0 0.0
    %628 = vmatpush1.msra.mxu0 %v608
    %629 = vmatprep.subr.mxu0 0.0
    %630 = vmatpush1.msra.mxu0 %v609
    %631 = vmatprep.subr.mxu0 0.0
    %632 = vmatpush1.msra.mxu0 %v610
    %633 = vmatprep.subr.mxu0 0.0
    %634 = vmatpush1.msra.mxu0 %v611
    %635 = vmatprep.subr.mxu0 0.0
    %636 = vmatpush1.msra.mxu0 %v612
    %637 = vmatprep.subr.mxu0 0.0
    %638 = vmatpush1.msra.mxu0 %v619
    %639 = vmatprep.subr.mxu0 0.0
    %640 = vmatpush1.msra.mxu0 0.0
    %641 = vmatprep.subr.mxu0 0.0
    %642 = vmatpush1.msra.mxu0 0.0
    %643 = vmatprep.subr.mxu0 0.0
    %644 = vmatpush1.msra.mxu0 0.0
    %645 = vmatprep.subr.mxu0 0.0
    %646 = vmatpush1.msra.mxu0 0.0
    %647 = vmatprep.subr.mxu0 0.0
    %648 = vmatpush1.msra.mxu0 0.0
    %649 = vmatprep.subr.mxu0 0.0
    %650 = vmatpush1.msra.mxu0 0.0
    %651 = vmatprep.subr.mxu0 0.0
    %652 = vmatpush1.msra.mxu0 0.0
    %653 = vmatprep.subr.mxu0 0.0
    %654 = vmatpush1.msra.mxu0 0.0
    %655 = vmatprep.subr.mxu0 0.0
    %656 = vmatpush1.msra.mxu0 0.0
    %657 = vmatprep.subr.mxu0 0.0
    %658 = vmatpush1.msra.mxu0 0.0
    %659 = vmatprep.subr.mxu0 0.0
    %660 = vmatpush1.msra.mxu0 0.0
    %661 = vmatprep.subr.mxu0 0.0
    %662 = vmatpush1.msra.mxu0 0.0
    %663 = vmatprep.subr.mxu0 0.0
    %664 = vmatpush1.msra.mxu0 0.0
    %665 = vmatprep.subr.mxu0 0.0
    %666 = vmatpush1.msra.mxu0 0.0
    %667 = vmatprep.subr.mxu0 0.0
    %668 = vmatpush1.msra.mxu0 0.0
    %669 = vmatprep.subr.mxu0 0.0
    %670 = vmatpush1.msra.mxu0 0.0
    %671 = vmatprep.subr.mxu0 0.0
    %672 = vmatpush1.msra.mxu0 0.0
    %673 = vmatprep.subr.mxu0 0.0
    %674 = vmatpush1.msra.mxu0 0.0
    %675 = vmatprep.subr.mxu0 0.0
    %676 = vmatpush1.msra.mxu0 0.0
    %677 = vmatprep.subr.mxu0 0.0
    %678 = vmatpush1.msra.mxu0 0.0
    %679 = vmatprep.subr.mxu0 0.0
    %680 = vmatpush1.msra.mxu0 0.0
    %681 = vmatprep.subr.mxu0 0.0
    %682 = vmatpush1.msra.mxu0 0.0
    %683 = vmatprep.subr.mxu0 0.0
    %684 = vmatpush1.msra.mxu0 0.0
    %685 = vmatprep.mubr.f32.mxu0 0.0
    %686 = vmatmul.mubr.f32.gmra.mrb[0].mxu0 %v616
    %v687 = vpop.f32.mrb[0].mxu0
    %v688 = vadd.f32 %v614, %v687
    %v689 = vpop.f32.mrb[0].mxu0
    %690 = vdwg.mxu0
    %v691 = vmax.f32 %v688, 0.0
    %v692 = vld [vmem:[#allocation4 + $0x158] sm:$0xff]
    %v693 = vld [vmem:[#allocation4 + $0x160] sm:$0xff]
    %v694 = vld [vmem:[#allocation4 + $0x168] sm:$0xff]
    %v695 = vld [vmem:[#allocation4 + $0x170] sm:$0xff]
    %v696 = vld [vmem:[#allocation4 + $0x178] sm:$0xff]
    %v697 = vld [vmem:[#allocation4 + $0x180] sm:$0xff]
    %v698 = vld [vmem:[#allocation4 + $0x188] sm:$0xff]
    %v699 = vld [vmem:[#allocation4 + $0x190] sm:$0xff]
    %v700 = vld [vmem:[#allocation4 + $0x198] sm:$0x1]
    %v702 = vsel %vm226, %v691, 0
    %704 = vmatprep.subr.mxu0 0.0
    %705 = vmatpush1.msra.mxu0 %v692
    %706 = vmatprep.subr.mxu0 0.0
    %707 = vmatpush1.msra.mxu0 %v693
    %708 = vmatprep.subr.mxu0 0.0
    %709 = vmatpush1.msra.mxu0 %v694
    %710 = vmatprep.subr.mxu0 0.0
    %711 = vmatpush1.msra.mxu0 %v695
    %712 = vmatprep.subr.mxu0 0.0
    %713 = vmatpush1.msra.mxu0 %v696
    %714 = vmatprep.subr.mxu0 0.0
    %715 = vmatpush1.msra.mxu0 %v697
    %716 = vmatprep.subr.mxu0 0.0
    %717 = vmatpush1.msra.mxu0 %v698
    %718 = vmatprep.subr.mxu0 0.0
    %719 = vmatpush1.msra.mxu0 %v699
    %720 = vmatprep.subr.mxu0 0.0
    %721 = vmatpush1.msra.mxu0 0.0
    %722 = vmatprep.subr.mxu0 0.0
    %723 = vmatpush1.msra.mxu0 0.0
    %724 = vmatprep.subr.mxu0 0.0
    %725 = vmatpush1.msra.mxu0 0.0
    %726 = vmatprep.subr.mxu0 0.0
    %727 = vmatpush1.msra.mxu0 0.0
    %728 = vmatprep.subr.mxu0 0.0
    %729 = vmatpush1.msra.mxu0 0.0
    %730 = vmatprep.subr.mxu0 0.0
    %731 = vmatpush1.msra.mxu0 0.0
    %732 = vmatprep.subr.mxu0 0.0
    %733 = vmatpush1.msra.mxu0 0.0
    %734 = vmatprep.subr.mxu0 0.0
    %735 = vmatpush1.msra.mxu0 0.0
    %736 = vmatprep.subr.mxu0 0.0
    %737 = vmatpush1.msra.mxu0 0.0
    %738 = vmatprep.subr.mxu0 0.0
    %739 = vmatpush1.msra.mxu0 0.0
    %740 = vmatprep.subr.mxu0 0.0
    %741 = vmatpush1.msra.mxu0 0.0
    %742 = vmatprep.subr.mxu0 0.0
    %743 = vmatpush1.msra.mxu0 0.0
    %744 = vmatprep.subr.mxu0 0.0
    %745 = vmatpush1.msra.mxu0 0.0
    %746 = vmatprep.subr.mxu0 0.0
    %747 = vmatpush1.msra.mxu0 0.0
    %748 = vmatprep.subr.mxu0 0.0
    %749 = vmatpush1.msra.mxu0 0.0
    %750 = vmatprep.subr.mxu0 0.0
    %751 = vmatpush1.msra.mxu0 0.0
    %752 = vmatprep.subr.mxu0 0.0
    %753 = vmatpush1.msra.mxu0 0.0
    %754 = vmatprep.subr.mxu0 0.0
    %755 = vmatpush1.msra.mxu0 0.0
    %756 = vmatprep.subr.mxu0 0.0
    %757 = vmatpush1.msra.mxu0 0.0
    %758 = vmatprep.subr.mxu0 0.0
    %759 = vmatpush1.msra.mxu0 0.0
    %760 = vmatprep.subr.mxu0 0.0
    %761 = vmatpush1.msra.mxu0 0.0
    %762 = vmatprep.subr.mxu0 0.0
    %763 = vmatpush1.msra.mxu0 0.0
    %764 = vmatprep.subr.mxu0 0.0
    %765 = vmatpush1.msra.mxu0 0.0
    %766 = vmatprep.subr.mxu0 0.0
    %767 = vmatpush1.msra.mxu0 0.0
    %768 = vmatprep.mubr.f32.mxu0 0.0
    %769 = vmatmul.mubr.f32.gmra.mrb[0].mxu0 %v702
    %v770 = vpop.f32.mrb[0].mxu0
    %v771 = vadd.f32 %v700, %v770
    %v772 = vpop.f32.mrb[0].mxu0
    %773 = vdwg.mxu0
    %v774 = vmax.f32 %v771, 0.0
    %v775 = vld [vmem:[#allocation4 + $0x1a0] sm:$0xff]
    %v776 = vld [vmem:[#allocation4 + $0x1a8] sm:$0xff]
    %v777 = vld [vmem:[#allocation4 + $0x1b0] sm:$0xff]
    %v778 = vld [vmem:[#allocation4 + $0x1b8] sm:$0xff]
    %v779 = vld [vmem:[#allocation4 + $0x1c0] sm:$0x1]
    %vm780 = vcmask 261120
    %v782 = vsel %vm780, %v774, 0
    %784 = vmatprep.subr.mxu0 0.0
    %785 = vmatpush1.msra.mxu0 %v775
    %786 = vmatprep.subr.mxu0 0.0
    %787 = vmatpush1.msra.mxu0 %v776
    %788 = vmatprep.subr.mxu0 0.0
    %789 = vmatpush1.msra.mxu0 %v777
    %790 = vmatprep.subr.mxu0 0.0
    %791 = vmatpush1.msra.mxu0 %v778
    %792 = vmatprep.subr.mxu0 0.0
    %793 = vmatpush1.msra.mxu0 0.0
    %794 = vmatprep.subr.mxu0 0.0
    %795 = vmatpush1.msra.mxu0 0.0
    %796 = vmatprep.subr.mxu0 0.0
    %797 = vmatpush1.msra.mxu0 0.0
    %798 = vmatprep.subr.mxu0 0.0
    %799 = vmatpush1.msra.mxu0 0.0
    %800 = vmatprep.subr.mxu0 0.0
    %801 = vmatpush1.msra.mxu0 0.0
    %802 = vmatprep.subr.mxu0 0.0
    %803 = vmatpush1.msra.mxu0 0.0
    %804 = vmatprep.subr.mxu0 0.0
    %805 = vmatpush1.msra.mxu0 0.0
    %806 = vmatprep.subr.mxu0 0.0
    %807 = vmatpush1.msra.mxu0 0.0
    %808 = vmatprep.subr.mxu0 0.0
    %809 = vmatpush1.msra.mxu0 0.0
    %810 = vmatprep.subr.mxu0 0.0
    %811 = vmatpush1.msra.mxu0 0.0
    %812 = vmatprep.subr.mxu0 0.0
    %813 = vmatpush1.msra.mxu0 0.0
    %814 = vmatprep.subr.mxu0 0.0
    %815 = vmatpush1.msra.mxu0 0.0
    %816 = vmatprep.subr.mxu0 0.0
    %817 = vmatpush1.msra.mxu0 0.0
    %818 = vmatprep.subr.mxu0 0.0
    %819 = vmatpush1.msra.mxu0 0.0
    %820 = vmatprep.subr.mxu0 0.0
    %821 = vmatpush1.msra.mxu0 0.0
    %822 = vmatprep.subr.mxu0 0.0
    %823 = vmatpush1.msra.mxu0 0.0
    %824 = vmatprep.subr.mxu0 0.0
    %825 = vmatpush1.msra.mxu0 0.0
    %826 = vmatprep.subr.mxu0 0.0
    %827 = vmatpush1.msra.mxu0 0.0
    %828 = vmatprep.subr.mxu0 0.0
    %829 = vmatpush1.msra.mxu0 0.0
    %830 = vmatprep.subr.mxu0 0.0
    %831 = vmatpush1.msra.mxu0 0.0
    %832 = vmatprep.subr.mxu0 0.0
    %833 = vmatpush1.msra.mxu0 0.0
    %834 = vmatprep.subr.mxu0 0.0
    %835 = vmatpush1.msra.mxu0 0.0
    %836 = vmatprep.subr.mxu0 0.0
    %837 = vmatpush1.msra.mxu0 0.0
    %838 = vmatprep.subr.mxu0 0.0
    %839 = vmatpush1.msra.mxu0 0.0
    %840 = vmatprep.subr.mxu0 0.0
    %841 = vmatpush1.msra.mxu0 0.0
    %842 = vmatprep.subr.mxu0 0.0
    %843 = vmatpush1.msra.mxu0 0.0
    %844 = vmatprep.subr.mxu0 0.0
    %845 = vmatpush1.msra.mxu0 0.0
    %846 = vmatprep.subr.mxu0 0.0
    %847 = vmatpush1.msra.mxu0 0.0
    %848 = vmatprep.mubr.f32.mxu0 0.0
    %849 = vmatmul.mubr.f32.gmra.mrb[0].mxu0 %v782
    %v850 = vpop.f32.mrb[0].mxu0
    %v851 = vadd.f32 %v779, %v850
    %v852 = vpop.f32.mrb[0].mxu0
    %853 = vdwg.mxu0
    %vm854 = vcmask 16384
    %v855 = vsel %vm854, %v851, -inf
    %856 = vmax.xlane.f32.xlu0 %v855
    %v857 = vpop.xlane.xlu0 %856
    %v858 = vsub.f32 %v851, %v857
    %v859 = vmul.f32 %v858, 1.442695
    %v860 = vpow.pop %v859
    %v861 = vsel %vm854, %v860, 0.0
    %862 = vadd.xlane.f32.xlu0 %v861
    %v863 = vpop.xlane.xlu0 %862
    %v864 = vrcp.pop %v863
    %v865 = vmul.f32 %v860, %v864
    %vm866 = vcmask 40984
    %v867 = vsel %vm866, %v851, -inf
    %868 = vmax.xlane.f32.xlu0 %v867
    %v869 = vpop.xlane.xlu0 %868
    %v870 = vsub.f32 %v851, %v869
    %v871 = vmul.f32 %v870, 1.442695
    %v872 = vpow.pop %v871
    %874 = vrot.lane.b32.xlu0 %v872, 125
    %v875 = vpop.permute.xlu0 %874
    %v877 = vsel %vm854, %v875, 0.0
    %878 = vadd.xlane.f32.xlu0 %v877
    %v879 = vpop.xlane.xlu0 %878
    %v880 = vrcp.pop %v879
    %v881 = vmul.f32 %v872, %v880
    %vm882 = vcmask 23552
    %v883 = vsel %vm882, %v865, %v881
    %vm884 = vcmask 40960
    %885 = vst.msk [vmem:[%s3] sm:$0x1] %vm884, %v883
    // Predicated region
    $region22: #{forward.1} parent=1 // pred_check
      _
    $region23: #{forward.1} parent=1 // pred_check_branch
      %887 = sbr.rel (0) target = $region25
    $region24: #{forward.1} parent=1 // pred_region
      _
    $region25: #{forward.1} parent=1 // pred_fallthru
      _
    // Predicated region
    $region26: #{forward.1} parent=1 // pred_check
      _
    $region27: #{forward.1} parent=1 // pred_check_branch
      %889 = sbr.rel (0) target = $region29
    $region28: #{forward.1} parent=1 // pred_region
      _
    $region29: #{forward.1} parent=1 // pred_fallthru
      _
    %890 = vsyncpa [#allocation3], 1
    %891 = vsyncpa [#allocation5], 1

</llo_original>
